<compile_context>
chip_gen: v5e
topology: v5e:2x2
jax: 0.10.0
libtpu: 0.0.40
codegen_flags: <defaults>
</compile_context>

<pallas_src>
import jax
import jax.numpy as jnp
from jax.experimental import pallas as pl
from jax.experimental.pallas import tpu as pltpu

EPS_GEM = 1e-6     # GeMPool clamp eps
EPS_NORM = 1e-12   # F.normalize default eps

_LANE = 128
_MAX_LANES = 8192                # caps the unrolled lane-add count (<=64/step)
_DEF_BLOCK_BYTES = 4 * 2 ** 20   # ~4 MiB blocks: >=2 MiB for HBM roofline,
                                 # small enough for v7x's 64 MiB VMEM when
                                 # double/triple buffered.


def _pick_hw_tile(hw, c, itemsize, block_bytes):
    """Spatial tile (lane count) sized by bytes: the largest 128-multiple for
    which one (1, C, hw_tile) block is <= block_bytes (capped, min 128)."""
    lanes = (block_bytes // max(1, c * itemsize)) // _LANE * _LANE
    lanes = max(_LANE, min(lanes, _MAX_LANES))
    if hw <= lanes:
        return hw          # full extent: legal even if not a 128-multiple
    return lanes


def _make_gem_kernel(hw_total, hw_tile, k_per, static_p, needs_mask, chunked):
    """Per-(batch, split, spatial-tile) kernel: accumulates the partial sum of
    clamp(l2norm(x), 1e-6) ** p over this split's valid spatial positions."""
    use_chain = (static_p is not None and float(static_p) == int(static_p)
                 and 1 <= int(static_p) <= 8)
    chain_n = int(static_p) if use_chain else 0

    def kernel(p_ref, x_ref, o_ref, acc_ref):
        # p_ref  : (1,)             f32 SMEM  runtime p (dynamic path only)
        # x_ref  : (1, C, hw_tile)  VMEM      input slab, native dtype
        # o_ref  : (1, 1, C, 1)     f32 VMEM  partial sum for this (b, s)
        # acc_ref: (C, 128)         f32 VMEM  lane-wide running accumulator
        s = pl.program_id(1)
        k = pl.program_id(2)

        @pl.when(k == 0)
        def _init():
            acc_ref[...] = jnp.zeros_like(acc_ref)

        xf = x_ref[0].astype(jnp.float32)                      # (C, T)

        # --- F.normalize(x, p=2, dim=channels); channels on sublanes ---
        sq = jnp.sum(xf * xf, axis=0, keepdims=True)           # (1, T)
        inv_norm = 1.0 / jnp.maximum(jnp.sqrt(sq), EPS_NORM)   # exact, (1, T)
        xn = xf * inv_norm

        # --- GeM: clamp(min=eps) ** p ---
        xc = jnp.maximum(xn, EPS_GEM)
        if use_chain:
            xp = xc
            for _ in range(chain_n - 1):
                xp = xp * xc                   # VPU multiply chain (p = 3)
        else:
            # Slow fallback: slab-wide pow = exp/log on the single EUP slot,
            # 2-4x slower than the static chain. Pass static_p in production.
            xp = jnp.power(xc, p_ref[0])

        if needs_mask:
            # Ragged tail / over-covered split: zero positions >= H*W so
            # padding never pollutes the sum (matters for small/dynamic p).
            start = (s * k_per + k) * hw_tile
            pos = jax.lax.broadcasted_iota(jnp.int32, (1, hw_tile), 1) + start
            xp = jnp.where(pos < hw_total, xp, 0.0)

        if chunked:
            # Lane-parallel accumulate on the VPU; the cross-lane XLU reduce
            # (and its lane-sparse store) happens only once, in finalize.
            partial = xp[:, 0:_LANE]
            for j in range(1, hw_tile // _LANE):
                partial = partial + xp[:, j * _LANE:(j + 1) * _LANE]
            acc_ref[...] += partial

            @pl.when(k == k_per - 1)
            def _finalize():
                col = jnp.sum(acc_ref[...], axis=1, keepdims=True)   # (C, 1)
                o_ref[...] = col[None, None]
        else:
            # hw_tile == H*W (single step per image): reduce directly.
            col = jnp.sum(xp, axis=1, keepdims=True)
            o_ref[...] = col[None, None]

    return kernel


def gem_pool(x_nchw, p, *, static_p=None, block_bytes=_DEF_BLOCK_BYTES,
             spatial_splits=None):
    """normalize + GeM pooling: (B, C, H, W) -> (B, C) descriptor (pre-fc)."""
    B, C, H, W = x_nchw.shape
    HW = H * W
    x_r = x_nchw.reshape(B, C, HW)       # free reshape; NATIVE dtype, no cast
    itemsize = x_r.dtype.itemsize

    hw_tile = _pick_hw_tile(HW, C, itemsize, block_bytes)
    num_k = pl.cdiv(HW, hw_tile)

    # Spatial splits on a second "parallel" grid axis keep both v7x
    # TensorCores busy when the batch alone cannot (B == 1).
    if spatial_splits is None:
        spatial_splits = 2 if (B == 1 and num_k >= 2) else 1
    S = max(1, min(int(spatial_splits), num_k))
    k_per = pl.cdiv(num_k, S)

    over = (S * k_per != num_k)                # some programs map past the end
    needs_mask = (S * k_per * hw_tile != HW)   # ragged tail or over-coverage
    chunked = (hw_tile % _LANE == 0)

    if over:
        def x_index(b, s, k):
            # Clamp out-of-range programs onto the last valid block; their
            # contribution is zeroed by the in-kernel mask (no OOB DMA).
            return (b, 0, jnp.minimum(s * k_per + k, num_k - 1))
    else:
        def x_index(b, s, k):
            return (b, 0, s * k_per + k)

    blk_bytes = C * hw_tile * itemsize
    buffered = chunked and blk_bytes < (1 << 20) and k_per >= 3
    if buffered:
        # Small blocks: deepen the pipeline to hide per-step DMA issue latency.
        x_spec = pl.BlockSpec((1, C, hw_tile), x_index,
                              pipeline_mode=pl.Buffered(3))
    else:
        x_spec = pl.BlockSpec((1, C, hw_tile), x_index)

    acc_bytes = C * _LANE * 4
    n_buf = 3 if buffered else 2
    vmem_limit = int(min(64 * 2 ** 20,
                         max(32 * 2 ** 20,
                             n_buf * blk_bytes + acc_bytes + 8 * 2 ** 20)))

    p_arr = jnp.asarray(p, jnp.float32).reshape(-1)[:1]      # (1,) runtime p

    kernel = _make_gem_kernel(HW, hw_tile, k_per, static_p, needs_mask, chunked)

    partial = pl.pallas_call(
        kernel,
        out_shape=jax.ShapeDtypeStruct((B, S, C, 1), jnp.float32),
        grid_spec=pltpu.PrefetchScalarGridSpec(
            num_scalar_prefetch=0,
            grid=(B, S, k_per),          # batch/split parallel, spatial last
            in_specs=[
                pl.BlockSpec(memory_space=pltpu.MemorySpace.SMEM),   # p
                x_spec,                                              # x slab
            ],
            out_specs=pl.BlockSpec((1, 1, C, 1), lambda b, s, k: (b, s, 0, 0)),
            scratch_shapes=[pltpu.VMEM((C, _LANE), jnp.float32)],
        ),
        compiler_params=pltpu.CompilerParams(
            dimension_semantics=("parallel", "parallel", "arbitrary"),
            vmem_limit_bytes=vmem_limit,
        ),
    )(p_arr, x_r)

    # Tiny XLA epilogue: combine splits, spatial mean, ** (1/p).
    sums = jnp.sum(partial[:, :, :, 0], axis=1)              # (B, C)
    pooled = jnp.power(sums * (1.0 / HW), 1.0 / p_arr[0])
    return pooled


def gem_forward(x_nchw, p, w, b, *, static_p=None, block_bytes=_DEF_BLOCK_BYTES,
                spatial_splits=None):
    """Full GeM forward: x (B,C,H,W), p (1,), w (out_dim, C), b (out_dim,)."""
    pooled = gem_pool(x_nchw, p, static_p=static_p, block_bytes=block_bytes,
                      spatial_splits=spatial_splits)
    w32 = jnp.asarray(w, jnp.float32)
    b32 = jnp.asarray(b, jnp.float32)
    # Tiny (B, C) @ (C, out_dim) GEMM, hoisted to XLA (perf review).
    return jnp.dot(pooled, w32.T,
                   precision=jax.lax.Precision.HIGHEST) + b32[None, :]


def gem_reference(x, p, w, b):
    """Pure-JAX (f32) reference mirroring the PyTorch forward."""
    x = jnp.asarray(x, jnp.float32)
    norm = jnp.sqrt(jnp.sum(x * x, axis=1, keepdims=True))
    xn = x / jnp.maximum(norm, EPS_NORM)
    xc = jnp.maximum(xn, EPS_GEM)
    pooled = jnp.mean(xc ** p[0], axis=(2, 3)) ** (1.0 / p[0])     # (B, C)
    return jnp.dot(pooled, w.T, precision=jax.lax.Precision.HIGHEST) + b


if __name__ == "__main__":
    B, C, H, W = 2, 4, 16, 16
    out_dim = 8

    key = jax.random.PRNGKey(0)
    kx, kw, kb = jax.random.split(key, 3)

    x = jax.random.normal(kx, (B, C, H, W), dtype=jnp.float32)

    # GeM default p = 3; nn.Linear-like parameter init.
    p = jnp.ones((1,), jnp.float32) * 3.0
    bound = 1.0 / (C ** 0.5)
    w = jax.random.uniform(kw, (out_dim, C), jnp.float32, -bound, bound)
    b = jax.random.uniform(kb, (out_dim,), jnp.float32, -bound, bound)

    tol = dict(atol=3e-5, rtol=3e-5)
    ref = gem_reference(x, p, w, b)

    # 1) Production path: f32 input, static p=3 chain, byte-sized single tile.
    out = jax.block_until_ready(gem_forward(x, p, w, b, static_p=3))
    assert out.shape == (B, out_dim), out.shape
    assert jnp.allclose(out, ref, **tol), (out, ref)

    # 2) Multi-step spatial accumulation (forced 128-lane tiles, 2 steps).
    out2 = jax.block_until_ready(
        gem_forward(x, p, w, b, static_p=3, block_bytes=2048))
    assert jnp.allclose(out2, ref, **tol), (out2, ref)

    # 3) bf16 ingestion: no wrapper cast; kernel casts to f32 after the load.
    x_bf = x.astype(jnp.bfloat16)
    ref_bf = gem_reference(x_bf, p, w, b)
    out_bf = jax.block_until_ready(
        gem_forward(x_bf, p, w, b, static_p=3, block_bytes=1024))
    assert jnp.allclose(out_bf, ref_bf, **tol), (out_bf, ref_bf)

    # 4) Ragged spatial tail (HW=480 -> 4 x 128-lane tiles, masked last tile)
    #    plus triple buffering for the small blocks.
    x_rag = jax.random.normal(kx, (B, C, 12, 40), dtype=jnp.float32)
    ref_rag = gem_reference(x_rag, p, w, b)
    out_rag = jax.block_until_ready(
        gem_forward(x_rag, p, w, b, static_p=3, block_bytes=2048))
    assert jnp.allclose(out_rag, ref_rag, **tol), (out_rag, ref_rag)

    # 5) B == 1: spatial reduction split across two cores; uneven split
    #    (3 tiles over 2 splits) exercises the clamped index_map + mask.
    x1 = jax.random.normal(kw, (1, C, 16, 24), dtype=jnp.float32)
    ref1 = gem_reference(x1, p, w, b)
    out1 = jax.block_until_ready(
        gem_forward(x1, p, w, b, static_p=3, block_bytes=2048))
    assert jnp.allclose(out1, ref1, **tol), (out1, ref1)

    # 6) Dynamic-p fallback (runtime exponent read from SMEM; slower by design).
    out_dyn = jax.block_until_ready(gem_forward(x, p, w, b))
    assert jnp.allclose(out_dyn, ref, **tol), (out_dyn, ref)

    print("KERNEL_OK")
</pallas_src>

<mosaic_0001>
module attributes {stable_mosaic.version = 11 : i64} {
  func.func @kernel(%arg0: i32, %arg1: i32, %arg2: i32, %arg3: memref<1xf32, #tpu.memory_space<smem>>, %arg4: memref<1x4x256xf32, #tpu.memory_space<vmem>>, %arg5: memref<1x1x4x1xf32, #tpu.memory_space<vmem>>, %arg6: memref<4x128xf32, #tpu.memory_space<vmem>>) attributes {dimension_semantics = [#tpu.dimension_semantics<parallel>, #tpu.dimension_semantics<parallel>, #tpu.dimension_semantics<arbitrary>], iteration_bounds = array<i64: 2, 1, 1>, scalar_prefetch = 0 : i64, scratch_operands = 1 : i64, tpu.core_type = #tpu.core_type<tc>, window_params = [{transform_indices = @transform_0, window_bounds = array<i64: 1>}, {transform_indices = @transform_1, window_bounds = array<i64: 1, 4, 256>}, {transform_indices = @transform_2, window_bounds = array<i64: 1, 1, 4, 1>}]} {
    %c0_i32 = arith.constant 0 : i32
    %0 = arith.cmpi eq, %arg2, %c0_i32 : i32
    %1 = arith.extui %0 : i1 to i32
    %c0_i32_0 = arith.constant 0 : i32
    %2 = arith.cmpi ne, %1, %c0_i32_0 : i32
    scf.if %2 {
      %cst_12 = arith.constant 0.000000e+00 : f32
      %28 = vector.broadcast %cst_12 : f32 to vector<4x128xf32>
      %c0_13 = arith.constant 0 : index
      %c0_14 = arith.constant 0 : index
      %29 = vector.load %arg6[%c0_13, %c0_14] : memref<4x128xf32, #tpu.memory_space<vmem>>, vector<4x128xf32>
      tpu.vector_store %arg6[%c0_13, %c0_14], %28 {strides = array<i32>} : memref<4x128xf32, #tpu.memory_space<vmem>>, vector<4x128xf32>,
    } else {
    }
    %c0 = arith.constant 0 : index
    %c0_1 = arith.constant 0 : index
    %c0_2 = arith.constant 0 : index
    %3 = vector.load %arg4[%c0, %c0_1, %c0_2] : memref<1x4x256xf32, #tpu.memory_space<vmem>>, vector<1x4x256xf32>
    %4 = vector.shape_cast %3 : vector<1x4x256xf32> to vector<4x256xf32>
    %5 = arith.mulf %4, %4 : vector<4x256xf32>
    %cst = arith.constant dense<0.000000e+00> : vector<256xf32>
    %6 = vector.multi_reduction <add>, %5, %cst [0] : vector<4x256xf32> to vector<256xf32>
    %7 = vector.shape_cast %6 : vector<256xf32> to vector<1x256xf32>
    %8 = math.sqrt %7 : vector<1x256xf32>
    %cst_3 = arith.constant 9.99999996E-13 : f32
    %9 = vector.broadcast %cst_3 : f32 to vector<1x256xf32>
    %10 = arith.maximumf %8, %9 : vector<1x256xf32>
    %cst_4 = arith.constant 1.000000e+00 : f32
    %11 = vector.broadcast %cst_4 : f32 to vector<1x256xf32>
    %12 = arith.divf %11, %10 : vector<1x256xf32>
    %13 = vector.broadcast %12 : vector<1x256xf32> to vector<4x256xf32>
    %14 = arith.mulf %4, %13 : vector<4x256xf32>
    %cst_5 = arith.constant 9.99999997E-7 : f32
    %15 = vector.broadcast %cst_5 : f32 to vector<4x256xf32>
    %16 = arith.maximumf %14, %15 : vector<4x256xf32>
    %17 = arith.mulf %16, %16 : vector<4x256xf32>
    %18 = arith.mulf %17, %16 : vector<4x256xf32>
    %19 = vector.extract_strided_slice %18 {offsets = [0, 0], sizes = [4, 128], strides = [1, 1]} : vector<4x256xf32> to vector<4x128xf32>
    %20 = vector.extract_strided_slice %18 {offsets = [0, 128], sizes = [4, 128], strides = [1, 1]} : vector<4x256xf32> to vector<4x128xf32>
    %21 = arith.addf %19, %20 : vector<4x128xf32>
    %c0_6 = arith.constant 0 : index
    %c0_7 = arith.constant 0 : index
    %22 = vector.load %arg6[%c0_6, %c0_7] : memref<4x128xf32, #tpu.memory_space<vmem>>, vector<4x128xf32>
    %23 = arith.addf %22, %21 : vector<4x128xf32>
    %c0_8 = arith.constant 0 : index
    %c0_9 = arith.constant 0 : index
    %24 = vector.load %arg6[%c0_8, %c0_9] : memref<4x128xf32, #tpu.memory_space<vmem>>, vector<4x128xf32>
    tpu.vector_store %arg6[%c0_8, %c0_9], %23 {strides = array<i32>} : memref<4x128xf32, #tpu.memory_space<vmem>>, vector<4x128xf32>,
    %c0_i32_10 = arith.constant 0 : i32
    %25 = arith.cmpi eq, %arg2, %c0_i32_10 : i32
    %26 = arith.extui %25 : i1 to i32
    %c0_i32_11 = arith.constant 0 : i32
    %27 = arith.cmpi ne, %26, %c0_i32_11 : i32
    scf.if %27 {
      %c0_12 = arith.constant 0 : index
      %c0_13 = arith.constant 0 : index
      %28 = vector.load %arg6[%c0_12, %c0_13] : memref<4x128xf32, #tpu.memory_space<vmem>>, vector<4x128xf32>
      %cst_14 = arith.constant dense<0.000000e+00> : vector<4xf32>
      %29 = vector.multi_reduction <add>, %28, %cst_14 [1] : vector<4x128xf32> to vector<4xf32>
      %30 = vector.shape_cast %29 : vector<4xf32> to vector<4x1xf32>
      %31 = vector.shape_cast %30 : vector<4x1xf32> to vector<1x1x4x1xf32>
      %c0_15 = arith.constant 0 : index
      %c0_16 = arith.constant 0 : index
      %c0_17 = arith.constant 0 : index
      %c0_18 = arith.constant 0 : index
      %32 = vector.load %arg5[%c0_15, %c0_16, %c0_17, %c0_18] : memref<1x1x4x1xf32, #tpu.memory_space<vmem>>, vector<1x1x4x1xf32>
      tpu.vector_store %arg5[%c0_15, %c0_16, %c0_17, %c0_18], %31 {strides = array<i32>} : memref<1x1x4x1xf32, #tpu.memory_space<vmem>>, vector<1x1x4x1xf32>,
    } else {
    }
    return
  }
  func.func @transform_0(%arg0: i32, %arg1: i32, %arg2: i32) -> i32 {
    %c0_i32 = arith.constant 0 : i32
    %c0_i32_0 = arith.constant 0 : i32
    return %c0_i32 : i32
  }
  func.func @transform_1(%arg0: i32, %arg1: i32, %arg2: i32) -> (i32, i32, i32) {
    %c1_i32 = arith.constant 1 : i32
    %0 = arith.muli %arg1, %c1_i32 : i32
    %1 = arith.addi %0, %arg2 : i32
    %c0_i32 = arith.constant 0 : i32
    %c0_i32_0 = arith.constant 0 : i32
    return %arg0, %c0_i32, %1 : i32, i32, i32
  }
  func.func @transform_2(%arg0: i32, %arg1: i32, %arg2: i32) -> (i32, i32, i32, i32) {
    %c0_i32 = arith.constant 0 : i32
    %c0_i32_0 = arith.constant 0 : i32
    %c0_i32_1 = arith.constant 0 : i32
    return %arg0, %arg1, %c0_i32, %c0_i32_0 : i32, i32, i32, i32
  }
}

</mosaic_0001>

<llo_original>
// kernel: tpu_custom_call.1
$region0: #{tpu_custom_call.1}
  #allocation0 [shape = 'u32[]', space=smem, size = 0x4, offset = 0x4, fixed_abs, tag = 'smem constant byte address 0x4 - core index']
  #allocation1 [shape = 'u32[72,128]{1,0:T(1,128)}', space=vmem, size = 0x9000, scoped, tag = 'internal scratch']
  #allocation2 [shape = 'f32[4,128]{1,0:T(4,128)}', space=vmem, size = 0x800, scoped, tag = 'scratch operand']
  #allocation3 [shape = 'f32[1]{0:T(128)S(6)}', space=smem, size = 0x200, scoped, tag = 'scoped memory for tpu_custom_call.1']
  %s0 = inlined_call_operand.<no memory space> [shape: f32[1], index: 0, kind: input, shape index: {}]
  %s1 = inlined_call_operand.hbm [shape: f32[2,4,256], index: 1, kind: input, shape index: {}]
  %s2 = inlined_call_operand.vmem [shape: f32[2,1,4,1], index: 2, kind: output, shape index: {}]
  %s3 = sld [smem:[#allocation0]]
  $region53: #{tpu_custom_call.1} parent=0
    _
  %s5 = ssub.s32 1, %s3
  %s6 = scalar_select 0, %s5, %s3
  %7 = sst [smem:[#allocation3]] %s0
  $region1: #{tpu_custom_call.1} parent=0
    #allocation4 [shape = 'u8[8192]{0}', space=vmem, size = 0x2000, scoped, tag = 'input window, operand 1']
    #allocation5 [shape = 's32[2]{0}', space=sflag, size = 0x8, scoped, tag = 'scoped memory for tpu_custom_call.1']
    %8 = vsyncpa [#allocation5], 0
    %s9 = scalar_lea.sflag [#allocation5], 1
    %10 = vsyncpa %s9, 0
    loop: start=0, step=1, limit=4
    $region2: #{tpu_custom_call.1} parent=1 // loop_pre_header
      _
    $region3: #{tpu_custom_call.1} parent=1 // loop_header
      %s12 = sphi 0, %s16
      %p13 = scmp.ge.s32.totalorder %s12, 4
      %s19 = sphi 0, %s38
      %s20 = sphi 0, %s34
      %s21 = sphi 0, %s30
      %s22 = sphi 0, %s19
      %s23 = sphi 0, %s20
      %s24 = sphi 0, %s21
      %s25 = sphi 0, %s22
      %s26 = sphi 0, %s23
      %s27 = sphi 0, %s24
      %s39 = sphi 0, %s39
      %s41 = sphi 0, %s39
      %s42 = sphi 0, %s41
      %s56 = sphi 0, %s42
      %s66 = sphi 0, %s68
      %s69 = sphi 0, %s66
      %s70 = sphi 0, %s69
      %s86 = sphi 0, %s70
      %s94 = sphi 0, %s96
      %s97 = sphi 0, %s94
      %s98 = sphi 0, %s97
      %s114 = sphi 0, %s98
    $region4: #{tpu_custom_call.1} parent=1 // loop_header_branch
      %15 = sbr.rel (%p13) target = $region8
    $region5: #{tpu_custom_call.1} parent=1 // loop_body
      %s17 = ssub.s32 %s12, 1
      %s18 = ssub.s32 %s12, 2
      %s28 = sadd.s32 1, %s21
      %p29 = scmp.ge.s32.totalorder %s28, 1
      %s30 = scalar_select %p29, 0, %s28
      %s31 = sadd.s32 1, %s20
      %s32 = scalar_select %p29, %s31, %s20
      %p33 = scmp.ge.s32.totalorder %s32, 1
      %s34 = scalar_select %p33, 0, %s32
      %s35 = sadd.s32 1, %s19
      %s36 = scalar_select %p33, %s35, %s19
      %p37 = scmp.ge.s32.totalorder %s36, 2
      %s38 = scalar_select %p37, 0, %s36
      %s40 = sadd.s32 %s39, 1
      %p43 = scmp.eq.s32.totalorder %s12, 1
      %p44 = scmp.ne.s32.totalorder %s39, %s41
      %p45 = scmp.eq.s32.totalorder %s12, 0
      %p46 = por %p44, %p45
      %p47 = scmp.ne.s32.totalorder %s39, %s41
      %p48 = scmp.eq.s32.totalorder %s17, 1
      %p49 = por %p47, %p48
      %p50 = scmp.ne.s32.totalorder %s41, %s42
      %p51 = scmp.eq.s32.totalorder %s17, 0
      %p52 = por %p50, %p51
      %p53 = scmp.ne.s32.totalorder %s41, %s42
      %p54 = scmp.eq.s32.totalorder %s18, 1
      %p55 = por %p53, %p54
      %p57 = scmp.ne.s32.totalorder %s42, %s56
      %p58 = scmp.eq.s32.totalorder %s18, 0
      %p59 = por %p57, %p58
      %s60 = sadd.s32 %s20, %s21
      %s61 = sadd.s32 %s34, %s30
      %s62 = ssub.s32 %s19, %s38
      %s63 = ssub.s32 %s60, %s61
      %s64 = sor.u32 %s62, %s63
      %p65 = scmp.eq.s32.totalorder %s64, 0
      %s67 = sadd.s32 %s66, 1
      %s68 = scalar_select %p65, %s66, %s67
      %p71 = pneg %p65
      %p72 = scmp.eq.s32.totalorder %s12, 1
      %p73 = por %p71, %p72
      %p74 = scmp.ne.s32.totalorder %s66, %s69
      %p75 = scmp.eq.s32.totalorder %s12, 0
      %p76 = por %p74, %p75
      %p77 = scmp.ne.s32.totalorder %s66, %s69
      %p78 = scmp.eq.s32.totalorder %s17, 1
      %p79 = por %p77, %p78
      %p80 = scmp.ne.s32.totalorder %s69, %s70
      %p81 = scmp.eq.s32.totalorder %s17, 0
      %p82 = por %p80, %p81
      %p83 = scmp.ne.s32.totalorder %s69, %s70
      %p84 = scmp.eq.s32.totalorder %s18, 1
      %p85 = por %p83, %p84
      %p87 = scmp.ne.s32.totalorder %s70, %s86
      %p88 = scmp.eq.s32.totalorder %s18, 0
      %p89 = por %p87, %p88
      %s90 = ssub.s32 %s19, %s38
      %s91 = ssub.s32 %s20, %s34
      %s92 = sor.u32 %s90, %s91
      %p93 = scmp.eq.s32.totalorder %s92, 0
      %s95 = sadd.s32 %s94, 1
      %s96 = scalar_select %p93, %s94, %s95
      %p99 = pneg %p93
      %p100 = scmp.eq.s32.totalorder %s12, 1
      %p101 = por %p99, %p100
      %p102 = scmp.ne.s32.totalorder %s94, %s97
      %p103 = scmp.eq.s32.totalorder %s12, 0
      %p104 = por %p102, %p103
      %p105 = scmp.ne.s32.totalorder %s94, %s97
      %p106 = scmp.eq.s32.totalorder %s17, 1
      %p107 = por %p105, %p106
      %p108 = scmp.ne.s32.totalorder %s97, %s98
      %p109 = scmp.eq.s32.totalorder %s17, 0
      %p110 = por %p108, %p109
      %p111 = scmp.ne.s32.totalorder %s97, %s98
      %p112 = scmp.eq.s32.totalorder %s18, 1
      %p113 = por %p111, %p112
      %p115 = scmp.ne.s32.totalorder %s98, %s114
      %p116 = scmp.eq.s32.totalorder %s18, 0
      %p117 = por %p115, %p116
      %p118 = scmp.le.s32.totalorder 1, %s12
      %p119 = scmp.lt.s32.totalorder %s12, 3
      %p120 = pnand %p118, %p119
      %p121 = pneg %p120
      // Predicated region
      $region9: #{tpu_custom_call.1} parent=5 // pred_check
        _
      $region10: #{tpu_custom_call.1} parent=5 // pred_check_branch
        %123 = sbr.rel (%p120) target = $region12
      $region11: #{tpu_custom_call.1} parent=5 // pred_region
        %s124 = ssub.s32 %s12, 1
        // Predicated region
        $region13: #{tpu_custom_call.1} parent=11 // pred_check
          %p125 = pneg %p52
        $region14: #{tpu_custom_call.1} parent=11 // pred_check_branch
          %127 = sbr.rel (%p125) target = $region16
        $region15: #{tpu_custom_call.1} parent=11 // pred_region
          _
        $region16: #{tpu_custom_call.1} parent=11 // pred_fallthru
          _
      $region12: #{tpu_custom_call.1} parent=5 // pred_fallthru
        _
      %p128 = scmp.lt.s32.totalorder %s12, 2
      // Predicated region
      $region17: #{tpu_custom_call.1} parent=5 // pred_check
        %p129 = pneg %p128
      $region18: #{tpu_custom_call.1} parent=5 // pred_check_branch
        %131 = sbr.rel (%p129) target = $region20
      $region19: #{tpu_custom_call.1} parent=5 // pred_region
        // Predicated region
        $region21: #{tpu_custom_call.1} parent=19 // pred_check
          %p132 = pneg %p76
        $region22: #{tpu_custom_call.1} parent=19 // pred_check_branch
          %134 = sbr.rel (%p132) target = $region24
        $region23: #{tpu_custom_call.1} parent=19 // pred_region
          %s135 = sand.u32 %s66, 1
          %s136 = scalar_lea.sflag [#allocation5], %s135
          %s137 = sand.u32 %s66, 1
          %s138 = smul.addr %s137, 8
          %s139 = scalar_lea.vmem [#allocation4], %s138
          %s140 = sadd.s32 %s20, %s21
          %s141 = smul.u32 2, %s140
          %143 = vsyncadd %s136, 0
          %s144 = smul.addr %s19, 2
          %s145 = sadd.s32 %s141, %s144
          %s146 = smul.addr %s145, 4
          %s147 = scalar_lea.hbm %s1, %s146
          %s149 = sshll.u32 %s147, 4
          %s150 = int_to_ptr.hbm [resolvable:$true] %s149
          %s151 = sshll.u32 %s139, 4
          %s152 = int_to_ptr.vmem [resolvable:$true] %s151
          %154 = dma.hbm_to_vmem [thread:$0]  %s150, 128, %s152, %s136
        $region24: #{tpu_custom_call.1} parent=19 // pred_fallthru
          _
      $region20: #{tpu_custom_call.1} parent=5 // pred_fallthru
        _
      %p155 = scmp.le.s32.totalorder 1, %s12
      %p156 = scmp.lt.s32.totalorder %s12, 3
      %p157 = pnand %p155, %p156
      %p158 = pneg %p157
      // Predicated region
      $region25: #{tpu_custom_call.1} parent=5 // pred_check
        _
      $region26: #{tpu_custom_call.1} parent=5 // pred_check_branch
        %160 = sbr.rel (%p157) target = $region28
      $region27: #{tpu_custom_call.1} parent=5 // pred_region
        %s161 = ssub.s32 %s12, 1
        %s162 = sand.u32 %s69, 1
        %s163 = scalar_lea.sflag [#allocation5], %s162
        %s164 = sand.u32 %s69, 1
        %s165 = smul.addr %s164, 8
        %s166 = scalar_lea.vmem [#allocation4], %s165
        // Predicated region
        $region29: #{tpu_custom_call.1} parent=27 // pred_check
          %p167 = pneg %p82
        $region30: #{tpu_custom_call.1} parent=27 // pred_check_branch
          %169 = sbr.rel (%p167) target = $region32
        $region31: #{tpu_custom_call.1} parent=27 // pred_region
          %171 = dma.done %s163, 128
        $region32: #{tpu_custom_call.1} parent=27 // pred_fallthru
          _
        %p172 = pneg %p52
        %p173 = pneg %p49
        %s174 = sand.u32 %s69, 1
        %s175 = scalar_lea.sflag [#allocation5], %s174
        %s176 = sand.u32 %s69, 1
        %s177 = smul.addr %s176, 8
        %s178 = scalar_lea.vmem [#allocation4], %s177
        %p179 = pneg %p82
        %p180 = pneg %p79
        %p181 = pneg %p110
        %p182 = pneg %p107
        %p183 = scmp.lt.s32.totalorder %s22, 1
        %s184 = scalar_select %p183, %s22, 1
        %p185 = scmp.lt.s32.totalorder %s23, 0
        %s186 = scalar_select %p185, %s23, 0
        %s187 = sadd.s32 %s186, %s184
        %s188 = smul.addr %s187, 4
        %s189 = scalar_lea.vmem %s2, %s188
        %s190 = sadd.s32 %s23, %s24
        %s191 = smul.u32 2, %s190
        %p192 = scmp.lt.s32.totalorder %s22, 1
        %s193 = scalar_select %p192, %s22, 1
        %p194 = scmp.lt.s32.totalorder %s23, 0
        %s195 = scalar_select %p194, %s23, 0
        %s196 = sadd.s32 %s195, %s193
        %s197 = smul.addr %s196, 4
        %s198 = scalar_lea.vmem %s2, %s197
        %p199 = scmp.eq.s32.totalorder %s24, 0
        // Predicated region
        $region33: #{tpu_custom_call.1} parent=27 // pred_check
          %p200 = pneg %p199
        $region34: #{tpu_custom_call.1} parent=27 // pred_check_branch
          %202 = sbr.rel (%p200) target = $region36
        $region35: #{tpu_custom_call.1} parent=27 // pred_region
          %203 = vst [vmem:[#allocation2] sm:$0xf] 0.0
        $region36: #{tpu_custom_call.1} parent=27 // pred_fallthru
          _
        %v204 = vld [vmem:[%s166] sm:$0xff]
        %v205 = vmul.f32 %v204, %v204
        %207 = vst [vmem:[#allocation1] ss:$2 sm:$0xff] %v205
        %v208 = vld.sshfl [vmem:[#allocation1] sm:$0xff pattern:$0x75316420]
        %v209 = vld.sshfl [vmem:[#allocation1 + $0x8] sm:$0xff pattern:$0x75316420]
        %vm212 = vcmask 1043456
        %v213 = vsel %vm212, %v208, 0.0
        %v214 = vrot.slane %v213, 4
        %v215 = vadd.f32 %v213, %v214
        %v216 = vrot.slane %v215, 2
        %v217 = vadd.f32 %v215, %v216
        %v218 = vrot.slane %v217, 1
        %v219 = vadd.f32 %v217, %v218
        %v220 = vsel %vm212, %v209, 0.0
        %v221 = vrot.slane %v220, 4
        %v222 = vadd.f32 %v220, %v221
        %v223 = vrot.slane %v222, 2
        %v224 = vadd.f32 %v222, %v223
        %v225 = vrot.slane %v224, 1
        %v226 = vadd.f32 %v224, %v225
        %v227 = vrsqrt.pop %v219
        %v228 = vmul.f32 %v227, %v219
        %v229 = vmul.f32 %v228, %v227
        %v230 = vmul.f32 0.5, %v229
        %v231 = vsub.f32 1.5, %v230
        %v232 = vmul.f32 %v227, %v231
        %v233 = vmul.f32 %v219, %v232
        %vm234 = vcmp.eq.f32.partialorder %v219, inf
        %v235 = vsel %vm234, %v219, %v233
        %vm236 = vcmp.eq.f32.partialorder %v219, 0.0
        %v237 = vand.u32 %v219, 2147483648
        %v238 = vsel %vm236, %v237, %v235
        %v239 = vrsqrt.pop %v226
        %v240 = vmul.f32 %v239, %v226
        %v241 = vmul.f32 %v240, %v239
        %v242 = vmul.f32 0.5, %v241
        %v243 = vsub.f32 1.5, %v242
        %v244 = vmul.f32 %v239, %v243
        %v245 = vmul.f32 %v226, %v244
        %vm246 = vcmp.eq.f32.partialorder %v226, inf
        %v247 = vsel %vm246, %v226, %v245
        %vm248 = vcmp.eq.f32.partialorder %v226, 0.0
        %v249 = vand.u32 %v226, 2147483648
        %v250 = vsel %vm248, %v249, %v247
        %v251 = vmax.f32 %v238, 1e-12
        %v252 = vmax.f32 %v250, 1e-12
        %v253 = vrcp.pop %v251
        %v254 = vmul.f32 %v251, %v253
        %v255 = vsub.f32 1.0, %v254
        %v256 = vmul.f32 %v253, %v255
        %v257 = vadd.f32 %v253, %v256
        %vm258 = vweird.f32 %v251
        %vm259 = vweird.f32 %v253
        %vm260 = vmor %vm258, %vm259
        %v261 = vsel %vm260, %v253, %v257
        %v262 = vand.u32 2147483647, %v251
        %vm263 = vcmp.eq.f32.partialorder %v262, 8.507059e+37
        %v264 = vand.u32 %v251, 2147483648
        %v265 = vor.u32 1.1754944e-38, %v264
        %v266 = vsel %vm263, %v265, %v261
        %v267 = vmul.f32 1.0, %v266
        %v268 = vrcp.pop %v252
        %v269 = vmul.f32 %v252, %v268
        %v270 = vsub.f32 1.0, %v269
        %v271 = vmul.f32 %v268, %v270
        %v272 = vadd.f32 %v268, %v271
        %vm273 = vweird.f32 %v252
        %vm274 = vweird.f32 %v268
        %vm275 = vmor %vm273, %vm274
        %v276 = vsel %vm275, %v268, %v272
        %v277 = vand.u32 2147483647, %v252
        %vm278 = vcmp.eq.f32.partialorder %v277, 8.507059e+37
        %v279 = vand.u32 %v252, 2147483648
        %v280 = vor.u32 1.1754944e-38, %v279
        %v281 = vsel %vm278, %v280, %v276
        %v282 = vmul.f32 1.0, %v281
        %v285 = vrot.slane %v282, 4
        %v286 = vsel %vm212, %v267, %v285
        %v288 = vmul.f32 %v204, %v286
        %v289 = vmax.f32 %v288, 1e-06
        %v290 = vmul.f32 %v289, %v289
        %v291 = vmul.f32 %v290, %v289
        %v293 = vrot.slane %v291, 4
        %v295 = vadd.f32 %v291, %v293
        %v296 = vld [vmem:[#allocation2] sm:$0xf]
        %v297 = vadd.f32 %v296, %v295
        %298 = vst [vmem:[#allocation2] sm:$0xf] %v297
        // Predicated region
        $region37: #{tpu_custom_call.1} parent=27 // pred_check
          %p299 = pneg %p199
        $region38: #{tpu_custom_call.1} parent=27 // pred_check_branch
          %301 = sbr.rel (%p299) target = $region40
        $region39: #{tpu_custom_call.1} parent=27 // pred_region
          %v302 = vld [vmem:[#allocation2] sm:$0xf]
          %v303 = vsel %vm212, %v302, 0.0
          %304 = vadd.xlane.f32.xlu0 %v303
          %v305 = vpop.xlane.xlu0 %304
          %vm306 = vcmask 3072
          %307 = vst.msk [vmem:[%s198] sm:$0xf] %vm306, %v305
        $region40: #{tpu_custom_call.1} parent=27 // pred_fallthru
          _
        %p308 = scmp.lt.s32.totalorder %s22, 1
        %s309 = scalar_select %p308, %s22, 1
        %p310 = scmp.lt.s32.totalorder %s23, 0
        %s311 = scalar_select %p310, %s23, 0
        %s312 = sadd.s32 %s311, %s309
        %s313 = smul.addr %s312, 4
        %s314 = scalar_lea.vmem %s2, %s313
        // Predicated region
        $region41: #{tpu_custom_call.1} parent=27 // pred_check
          %p315 = pneg %p107
        $region42: #{tpu_custom_call.1} parent=27 // pred_check_branch
          %317 = sbr.rel (%p315) target = $region44
        $region43: #{tpu_custom_call.1} parent=27 // pred_region
          _
        $region44: #{tpu_custom_call.1} parent=27 // pred_fallthru
          _
      $region28: #{tpu_custom_call.1} parent=5 // pred_fallthru
        _
      %p318 = scmp.le.s32.totalorder 2, %s12
      // Predicated region
      $region45: #{tpu_custom_call.1} parent=5 // pred_check
        %p319 = pneg %p318
      $region46: #{tpu_custom_call.1} parent=5 // pred_check_branch
        %321 = sbr.rel (%p319) target = $region48
      $region47: #{tpu_custom_call.1} parent=5 // pred_region
        %s322 = ssub.s32 %s12, 2
        // Predicated region
        $region49: #{tpu_custom_call.1} parent=47 // pred_check
          %p323 = pneg %p113
        $region50: #{tpu_custom_call.1} parent=47 // pred_check_branch
          %325 = sbr.rel (%p323) target = $region52
        $region51: #{tpu_custom_call.1} parent=47 // pred_region
          %p326 = scmp.lt.s32.totalorder %s25, 1
          %s327 = scalar_select %p326, %s25, 1
          %p328 = scmp.lt.s32.totalorder %s26, 0
          %s329 = scalar_select %p328, %s26, 0
          %s330 = sadd.s32 %s329, %s327
          %s331 = smul.addr %s330, 4
          %s332 = scalar_lea.vmem %s2, %s331
        $region52: #{tpu_custom_call.1} parent=47 // pred_fallthru
          _
      $region48: #{tpu_custom_call.1} parent=5 // pred_fallthru
        _
    $region6: #{tpu_custom_call.1} parent=1 // loop_footer
      %s16 = sadd.s32 1, %s12
    $region7: #{tpu_custom_call.1} parent=1 // loop_footer_branch
      %11 = sbr.rel target = $region3
    $region8: #{tpu_custom_call.1} parent=1 // loop_exit
      _
    %333 = vsyncpa [#allocation5], 1
    %s334 = scalar_lea.sflag [#allocation5], 1
    %335 = vsyncpa %s334, 1

</llo_original>
